<compile_context>
chip_gen: v5e
topology: v5e:2x2
jax: 0.10.0
libtpu: 0.0.40
codegen_flags: <defaults>
</compile_context>

<pallas_src>
import jax
import jax.numpy as jnp
from jax import lax
from jax.experimental import pallas as pl
from jax.experimental.pallas import tpu as pltpu

HIDDEN = 64  # GRU hidden size == input size


def _gru_recurrence_kernel(gi_ref, h0_ref, whh_ref, bhn_ref, out_ref, h_scr):
    """Runs T timesteps of the GRU recurrence for one time block.

    gi_ref  : (T, B, 3H) hoisted input projections, lane-packed [r | z | n],
              biases (b_ih+b_hh) folded for r/z, b_ih folded for n.
    h0_ref  : (B, H)     initial hidden state
    whh_ref : (H, 3H)    packed W_hh^T, column blocks [r | z | n]
    bhn_ref : (1, H)     b_hh_n (must stay inside r * (h @ W_hn^T + b_hn))
    out_ref : (T, B, H)  h_t for every timestep of this block
    h_scr   : (B, H) f32 hidden-state carry across time blocks
    """
    T = out_ref.shape[0]
    H = h0_ref.shape[1]

    @pl.when(pl.program_id(0) == 0)
    def _():
        h_scr[...] = h0_ref[...].astype(jnp.float32)

    # Hoisted out of the time loop (JAX does not CSE these per iteration).
    whh = whh_ref[...]          # (H, 3H)
    b_hn = bhn_ref[...]         # (1, H)

    def step(t, h):
        # Single fused hidden-side matmul on the serial critical path:
        # (B, H) x (H, 3H).  One MXU pass on v6e/v7x (256-wide), two on v5e,
        # either way strictly fewer round-trips than three separate dots.
        gh = jnp.dot(h, whh, preferred_element_type=jnp.float32)   # (B, 3H)
        gi = gi_ref[t]                                             # (B, 3H)

        # [r | z] packed in lanes 0:2H -> one dense 128-lane sigmoid.
        rz = jax.nn.sigmoid(gi[:, :2 * H] + gh[:, :2 * H])
        r = rz[:, :H]
        z = rz[:, H:]
        n = jnp.tanh(gi[:, 2 * H:] + r * (gh[:, 2 * H:] + b_hn))
        h_new = (1.0 - z) * n + z * h

        out_ref[t] = h_new.astype(out_ref.dtype)
        return h_new

    # Short fixed trip count -> unroll for LLO scheduler visibility.
    h_scr[...] = lax.fori_loop(0, T, step, h_scr[...],
                               unroll=T if T <= 16 else 8)


def _lane_pad(n):
    return ((n + 127) // 128) * 128


def up_rnn_forward(x, h0, w_ih, w_hh, b_ih, b_hh, *, max_block=256):
    """UpRNN.forward: output, hn = GRU(x, h0); return transpose(output, 1, 2).

    x    : (B, S, 64)  batch-first input
    h0   : (B, 64) or PyTorch-shaped (1, B, 64) initial hidden state
    w_ih : (192, 64)   PyTorch weight_ih_l0 (row blocks [r; z; n])
    w_hh : (192, 64)   PyTorch weight_hh_l0
    b_ih : (192,)      PyTorch bias_ih_l0
    b_hh : (192,)      PyTorch bias_hh_l0
    returns (B, 64, S)
    """
    B, S, H = x.shape
    assert H == HIDDEN
    if h0.ndim == 3:            # accept PyTorch-shaped (num_layers=1, B, H)
        h0 = h0[0]

    f32 = jnp.float32

    # ---- one-time parameter prep (tiny, XLA-side) ---------------------------
    wih_t = jnp.transpose(w_ih.reshape(3, H, H), (0, 2, 1)).astype(f32)  # (3,Hin,Hout)
    whh_t = jnp.transpose(w_hh.reshape(3, H, H), (0, 2, 1)).astype(f32)
    wih_all = jnp.concatenate([wih_t[0], wih_t[1], wih_t[2]], axis=1)    # (H, 3H)
    whh_all = jnp.concatenate([whh_t[0], whh_t[1], whh_t[2]], axis=1)    # (H, 3H)

    b_ih3 = b_ih.reshape(3, H).astype(f32)
    b_hh3 = b_hh.reshape(3, H).astype(f32)
    # Fold (b_ih + b_hh) for r/z and b_ih for n into the hoisted projection.
    bi_all = jnp.concatenate([b_ih3[0] + b_hh3[0],
                              b_ih3[1] + b_hh3[1],
                              b_ih3[2]])                                 # (3H,)
    b_hn = b_hh3[2].reshape(1, H)

    # ---- hoisted input projection: one batched matmul, no h dependence ------
    # Emitted directly time-major and lane-packed: (S, B, 3H), gates [r|z|n].
    gi = jnp.einsum('bsh,hk->sbk', x.astype(f32), wih_all)
    gi = gi + bi_all[None, None, :]

    # ---- time blocking: cdiv grid + zero-padded tail (no divisor search) ----
    block_vmem_budget = 8 * 1024 * 1024          # conservative; fits v7x scoped VMEM
    sub_b = max(B, 8)                            # sublane-padded batch estimate
    # double-buffered gi block + out block, lane-padded, f32
    bytes_per_step = 2 * sub_b * (_lane_pad(3 * H) + _lane_pad(H)) * 4
    T = int(max(1, min(S, max_block, block_vmem_budget // bytes_per_step)))
    num_blocks = pl.cdiv(S, T)
    S_pad = num_blocks * T
    if S_pad != S:
        gi = jnp.pad(gi, ((0, S_pad - S), (0, 0), (0, 0)))

    block_bytes = T * bytes_per_step
    vmem_limit = int(min(32 * 1024 * 1024,
                         max(4 * 1024 * 1024, 2 * block_bytes)))

    # ---- time-blocked recurrent kernel ---------------------------------------
    out_tm = pl.pallas_call(
        _gru_recurrence_kernel,
        out_shape=jax.ShapeDtypeStruct((S_pad, B, H), x.dtype),
        grid_spec=pltpu.PrefetchScalarGridSpec(
            num_scalar_prefetch=0,
            grid=(num_blocks,),
            in_specs=[
                pl.BlockSpec((T, B, 3 * H), lambda i: (i, 0, 0)),   # packed gi
                pl.BlockSpec((B, H), lambda i: (0, 0)),             # h0
                pl.BlockSpec((H, 3 * H), lambda i: (0, 0)),         # packed W_hh^T
                pl.BlockSpec((1, H), lambda i: (0, 0)),             # b_hh_n
            ],
            out_specs=pl.BlockSpec((T, B, H), lambda i: (i, 0, 0)),
            scratch_shapes=[pltpu.VMEM((B, H), jnp.float32)],       # h carry
        ),
        compiler_params=pltpu.CompilerParams(
            dimension_semantics=("arbitrary",),   # time is inherently sequential
            vmem_limit_bytes=vmem_limit,
        ),
    )(gi, h0.astype(f32), whh_all, b_hn)

    # PyTorch: output = torch.transpose(output, 1, 2)  ->  (B, H, S)
    return jnp.transpose(out_tm[:S], (1, 2, 0))


def gru_reference(x, h0, w_ih, w_hh, b_ih, b_hh):
    """Pure-JAX reference of PyTorch nn.GRU forward (batch_first) + transpose."""
    H = HIDDEN

    def step(h, x_t):
        gi = x_t @ w_ih.T + b_ih
        gh = h @ w_hh.T + b_hh
        r = jax.nn.sigmoid(gi[:, 0 * H:1 * H] + gh[:, 0 * H:1 * H])
        z = jax.nn.sigmoid(gi[:, 1 * H:2 * H] + gh[:, 1 * H:2 * H])
        n = jnp.tanh(gi[:, 2 * H:3 * H] + r * gh[:, 2 * H:3 * H])
        h_new = (1.0 - z) * n + z * h
        return h_new, h_new

    _, outs = jax.lax.scan(step, h0, jnp.transpose(x, (1, 0, 2)))
    return jnp.transpose(outs, (1, 2, 0))  # (B, H, S)


if __name__ == "__main__":
    B, S, H = 2, 8, HIDDEN

    key = jax.random.PRNGKey(0)
    kx, kh, k1, k2, k3, k4 = jax.random.split(key, 6)

    # Example input: (batch, seq, 64), batch_first.
    x = jax.random.normal(kx, (B, S, H), dtype=jnp.float32)

    # TODO(synk): the PyTorch module draws h0 = torch.randn(...) per forward on
    # CUDA; here it is a deterministic input generated from PRNGKey(0).
    h0 = jax.random.normal(kh, (1, B, H), dtype=jnp.float32)   # PyTorch shape

    # GRU parameters, PyTorch shapes/ordering, uniform(-1/sqrt(H), 1/sqrt(H)).
    bound = 1.0 / jnp.sqrt(jnp.float32(H))
    w_ih = jax.random.uniform(k1, (3 * H, H), jnp.float32, -bound, bound)
    w_hh = jax.random.uniform(k2, (3 * H, H), jnp.float32, -bound, bound)
    b_ih = jax.random.uniform(k3, (3 * H,), jnp.float32, -bound, bound)
    b_hh = jax.random.uniform(k4, (3 * H,), jnp.float32, -bound, bound)

    out = jax.block_until_ready(up_rnn_forward(x, h0, w_ih, w_hh, b_ih, b_hh))
    ref = gru_reference(x, h0[0], w_ih, w_hh, b_ih, b_hh)
    assert out.shape == (B, H, S), out.shape
    assert jnp.allclose(out, ref, atol=1e-5, rtol=1e-5), "mismatch vs reference GRU"

    # Exercise the cdiv grid + zero-padded tail + multi-block h carry path.
    S2 = 10
    x2 = jax.random.normal(jax.random.PRNGKey(1), (B, S2, H), dtype=jnp.float32)
    out2 = jax.block_until_ready(
        up_rnn_forward(x2, h0, w_ih, w_hh, b_ih, b_hh, max_block=4))
    ref2 = gru_reference(x2, h0[0], w_ih, w_hh, b_ih, b_hh)
    assert out2.shape == (B, H, S2), out2.shape
    assert jnp.allclose(out2, ref2, atol=1e-5, rtol=1e-5), "mismatch (padded tail)"

    print("KERNEL_OK")
</pallas_src>

<mosaic_0001>
module attributes {stable_mosaic.version = 11 : i64} {
  func.func @_gru_recurrence_kernel(%arg0: i32, %arg1: memref<8x2x192xf32, #tpu.memory_space<vmem>>, %arg2: memref<2x64xf32, #tpu.memory_space<vmem>>, %arg3: memref<64x192xf32, #tpu.memory_space<vmem>>, %arg4: memref<1x64xf32, #tpu.memory_space<vmem>>, %arg5: memref<8x2x64xf32, #tpu.memory_space<vmem>>, %arg6: memref<2x64xf32, #tpu.memory_space<vmem>>) attributes {dimension_semantics = [#tpu.dimension_semantics<arbitrary>], iteration_bounds = array<i64: 1>, scalar_prefetch = 0 : i64, scratch_operands = 1 : i64, tpu.core_type = #tpu.core_type<tc>, window_params = [{transform_indices = @transform_0, window_bounds = array<i64: 8, 2, 192>}, {pipeline_mode = #tpu.pipeline_mode<synchronous>, transform_indices = @transform_1, window_bounds = array<i64: 2, 64>}, {pipeline_mode = #tpu.pipeline_mode<synchronous>, transform_indices = @transform_2, window_bounds = array<i64: 64, 192>}, {pipeline_mode = #tpu.pipeline_mode<synchronous>, transform_indices = @transform_3, window_bounds = array<i64: 1, 64>}, {transform_indices = @transform_4, window_bounds = array<i64: 8, 2, 64>}]} {
    %c0_i32 = arith.constant 0 : i32
    %0 = arith.cmpi eq, %arg0, %c0_i32 : i32
    %1 = arith.extui %0 : i1 to i32
    %c0_i32_0 = arith.constant 0 : i32
    %2 = arith.cmpi ne, %1, %c0_i32_0 : i32
    scf.if %2 {
      %c0_64 = arith.constant 0 : index
      %c0_65 = arith.constant 0 : index
      %247 = vector.load %arg2[%c0_64, %c0_65] : memref<2x64xf32, #tpu.memory_space<vmem>>, vector<2x64xf32>
      %c0_66 = arith.constant 0 : index
      %c0_67 = arith.constant 0 : index
      %248 = vector.load %arg6[%c0_66, %c0_67] : memref<2x64xf32, #tpu.memory_space<vmem>>, vector<2x64xf32>
      tpu.vector_store %arg6[%c0_66, %c0_67], %247 {strides = array<i32>} : memref<2x64xf32, #tpu.memory_space<vmem>>, vector<2x64xf32>,
    } else {
    }
    %c0 = arith.constant 0 : index
    %c0_1 = arith.constant 0 : index
    %3 = vector.load %arg3[%c0, %c0_1] : memref<64x192xf32, #tpu.memory_space<vmem>>, vector<64x192xf32>
    %c0_2 = arith.constant 0 : index
    %c0_3 = arith.constant 0 : index
    %4 = vector.load %arg4[%c0_2, %c0_3] : memref<1x64xf32, #tpu.memory_space<vmem>>, vector<1x64xf32>
    %c0_4 = arith.constant 0 : index
    %c0_5 = arith.constant 0 : index
    %5 = vector.load %arg6[%c0_4, %c0_5] : memref<2x64xf32, #tpu.memory_space<vmem>>, vector<2x64xf32>
    %c0_i32_6 = arith.constant 0 : i32
    %cst = arith.constant dense<0.000000e+00> : vector<2x192xf32>
    %6 = tpu.matmul %5, %3, %cst {dimension_numbers = #tpu.dot_dimension_numbers<[1], [0], [0], [1], [0, 0, 1, 1], [], []>} : vector<2x64xf32>, vector<64x192xf32>, vector<2x192xf32> -> vector<2x192xf32>
    %7 = arith.index_cast %c0_i32_6 : i32 to index
    %c0_7 = arith.constant 0 : index
    %c0_8 = arith.constant 0 : index
    %8 = vector.load %arg1[%7, %c0_7, %c0_8] : memref<8x2x192xf32, #tpu.memory_space<vmem>>, vector<1x2x192xf32>
    %9 = vector.shape_cast %8 : vector<1x2x192xf32> to vector<2x192xf32>
    %10 = vector.extract_strided_slice %9 {offsets = [0, 0], sizes = [2, 128], strides = [1, 1]} : vector<2x192xf32> to vector<2x128xf32>
    %11 = vector.extract_strided_slice %6 {offsets = [0, 0], sizes = [2, 128], strides = [1, 1]} : vector<2x192xf32> to vector<2x128xf32>
    %12 = arith.addf %10, %11 : vector<2x128xf32>
    %13 = arith.negf %12 : vector<2x128xf32>
    %14 = math.exp %13 : vector<2x128xf32>
    %cst_9 = arith.constant 1.000000e+00 : f32
    %15 = vector.broadcast %cst_9 : f32 to vector<2x128xf32>
    %16 = arith.addf %15, %14 : vector<2x128xf32>
    %17 = arith.divf %15, %16 : vector<2x128xf32>
    %18 = vector.extract_strided_slice %17 {offsets = [0, 0], sizes = [2, 64], strides = [1, 1]} : vector<2x128xf32> to vector<2x64xf32>
    %19 = vector.extract_strided_slice %17 {offsets = [0, 64], sizes = [2, 64], strides = [1, 1]} : vector<2x128xf32> to vector<2x64xf32>
    %20 = vector.extract_strided_slice %9 {offsets = [0, 128], sizes = [2, 64], strides = [1, 1]} : vector<2x192xf32> to vector<2x64xf32>
    %21 = vector.extract_strided_slice %6 {offsets = [0, 128], sizes = [2, 64], strides = [1, 1]} : vector<2x192xf32> to vector<2x64xf32>
    %22 = vector.broadcast %4 : vector<1x64xf32> to vector<2x64xf32>
    %23 = arith.addf %21, %22 : vector<2x64xf32>
    %24 = arith.mulf %18, %23 : vector<2x64xf32>
    %25 = arith.addf %20, %24 : vector<2x64xf32>
    %26 = math.tanh %25 : vector<2x64xf32>
    %cst_10 = arith.constant 1.000000e+00 : f32
    %27 = vector.broadcast %cst_10 : f32 to vector<2x64xf32>
    %28 = arith.subf %27, %19 : vector<2x64xf32>
    %29 = arith.mulf %28, %26 : vector<2x64xf32>
    %30 = arith.mulf %19, %5 : vector<2x64xf32>
    %31 = arith.addf %29, %30 : vector<2x64xf32>
    %32 = arith.index_cast %c0_i32_6 : i32 to index
    %c0_11 = arith.constant 0 : index
    %c0_12 = arith.constant 0 : index
    %33 = vector.load %arg5[%32, %c0_11, %c0_12] : memref<8x2x64xf32, #tpu.memory_space<vmem>>, vector<1x2x64xf32>
    %34 = vector.shape_cast %33 : vector<1x2x64xf32> to vector<2x64xf32>
    %35 = vector.shape_cast %31 : vector<2x64xf32> to vector<1x2x64xf32>
    tpu.vector_store %arg5[%32, %c0_11, %c0_12], %35 {strides = array<i32>} : memref<8x2x64xf32, #tpu.memory_space<vmem>>, vector<1x2x64xf32>,
    %c1_i32 = arith.constant 1 : i32
    %cst_13 = arith.constant dense<0.000000e+00> : vector<2x192xf32>
    %36 = tpu.matmul %31, %3, %cst_13 {dimension_numbers = #tpu.dot_dimension_numbers<[1], [0], [0], [1], [0, 0, 1, 1], [], []>} : vector<2x64xf32>, vector<64x192xf32>, vector<2x192xf32> -> vector<2x192xf32>
    %37 = arith.index_cast %c1_i32 : i32 to index
    %c0_14 = arith.constant 0 : index
    %c0_15 = arith.constant 0 : index
    %38 = vector.load %arg1[%37, %c0_14, %c0_15] : memref<8x2x192xf32, #tpu.memory_space<vmem>>, vector<1x2x192xf32>
    %39 = vector.shape_cast %38 : vector<1x2x192xf32> to vector<2x192xf32>
    %40 = vector.extract_strided_slice %39 {offsets = [0, 0], sizes = [2, 128], strides = [1, 1]} : vector<2x192xf32> to vector<2x128xf32>
    %41 = vector.extract_strided_slice %36 {offsets = [0, 0], sizes = [2, 128], strides = [1, 1]} : vector<2x192xf32> to vector<2x128xf32>
    %42 = arith.addf %40, %41 : vector<2x128xf32>
    %43 = arith.negf %42 : vector<2x128xf32>
    %44 = math.exp %43 : vector<2x128xf32>
    %cst_16 = arith.constant 1.000000e+00 : f32
    %45 = vector.broadcast %cst_16 : f32 to vector<2x128xf32>
    %46 = arith.addf %45, %44 : vector<2x128xf32>
    %47 = arith.divf %45, %46 : vector<2x128xf32>
    %48 = vector.extract_strided_slice %47 {offsets = [0, 0], sizes = [2, 64], strides = [1, 1]} : vector<2x128xf32> to vector<2x64xf32>
    %49 = vector.extract_strided_slice %47 {offsets = [0, 64], sizes = [2, 64], strides = [1, 1]} : vector<2x128xf32> to vector<2x64xf32>
    %50 = vector.extract_strided_slice %39 {offsets = [0, 128], sizes = [2, 64], strides = [1, 1]} : vector<2x192xf32> to vector<2x64xf32>
    %51 = vector.extract_strided_slice %36 {offsets = [0, 128], sizes = [2, 64], strides = [1, 1]} : vector<2x192xf32> to vector<2x64xf32>
    %52 = vector.broadcast %4 : vector<1x64xf32> to vector<2x64xf32>
    %53 = arith.addf %51, %52 : vector<2x64xf32>
    %54 = arith.mulf %48, %53 : vector<2x64xf32>
    %55 = arith.addf %50, %54 : vector<2x64xf32>
    %56 = math.tanh %55 : vector<2x64xf32>
    %cst_17 = arith.constant 1.000000e+00 : f32
    %57 = vector.broadcast %cst_17 : f32 to vector<2x64xf32>
    %58 = arith.subf %57, %49 : vector<2x64xf32>
    %59 = arith.mulf %58, %56 : vector<2x64xf32>
    %60 = arith.mulf %49, %31 : vector<2x64xf32>
    %61 = arith.addf %59, %60 : vector<2x64xf32>
    %62 = arith.index_cast %c1_i32 : i32 to index
    %c0_18 = arith.constant 0 : index
    %c0_19 = arith.constant 0 : index
    %63 = vector.load %arg5[%62, %c0_18, %c0_19] : memref<8x2x64xf32, #tpu.memory_space<vmem>>, vector<1x2x64xf32>
    %64 = vector.shape_cast %63 : vector<1x2x64xf32> to vector<2x64xf32>
    %65 = vector.shape_cast %61 : vector<2x64xf32> to vector<1x2x64xf32>
    tpu.vector_store %arg5[%62, %c0_18, %c0_19], %65 {strides = array<i32>} : memref<8x2x64xf32, #tpu.memory_space<vmem>>, vector<1x2x64xf32>,
    %c2_i32 = arith.constant 2 : i32
    %cst_20 = arith.constant dense<0.000000e+00> : vector<2x192xf32>
    %66 = tpu.matmul %61, %3, %cst_20 {dimension_numbers = #tpu.dot_dimension_numbers<[1], [0], [0], [1], [0, 0, 1, 1], [], []>} : vector<2x64xf32>, vector<64x192xf32>, vector<2x192xf32> -> vector<2x192xf32>
    %67 = arith.index_cast %c2_i32 : i32 to index
    %c0_21 = arith.constant 0 : index
    %c0_22 = arith.constant 0 : index
    %68 = vector.load %arg1[%67, %c0_21, %c0_22] : memref<8x2x192xf32, #tpu.memory_space<vmem>>, vector<1x2x192xf32>
    %69 = vector.shape_cast %68 : vector<1x2x192xf32> to vector<2x192xf32>
    %70 = vector.extract_strided_slice %69 {offsets = [0, 0], sizes = [2, 128], strides = [1, 1]} : vector<2x192xf32> to vector<2x128xf32>
    %71 = vector.extract_strided_slice %66 {offsets = [0, 0], sizes = [2, 128], strides = [1, 1]} : vector<2x192xf32> to vector<2x128xf32>
    %72 = arith.addf %70, %71 : vector<2x128xf32>
    %73 = arith.negf %72 : vector<2x128xf32>
    %74 = math.exp %73 : vector<2x128xf32>
    %cst_23 = arith.constant 1.000000e+00 : f32
    %75 = vector.broadcast %cst_23 : f32 to vector<2x128xf32>
    %76 = arith.addf %75, %74 : vector<2x128xf32>
    %77 = arith.divf %75, %76 : vector<2x128xf32>
    %78 = vector.extract_strided_slice %77 {offsets = [0, 0], sizes = [2, 64], strides = [1, 1]} : vector<2x128xf32> to vector<2x64xf32>
    %79 = vector.extract_strided_slice %77 {offsets = [0, 64], sizes = [2, 64], strides = [1, 1]} : vector<2x128xf32> to vector<2x64xf32>
    %80 = vector.extract_strided_slice %69 {offsets = [0, 128], sizes = [2, 64], strides = [1, 1]} : vector<2x192xf32> to vector<2x64xf32>
    %81 = vector.extract_strided_slice %66 {offsets = [0, 128], sizes = [2, 64], strides = [1, 1]} : vector<2x192xf32> to vector<2x64xf32>
    %82 = vector.broadcast %4 : vector<1x64xf32> to vector<2x64xf32>
    %83 = arith.addf %81, %82 : vector<2x64xf32>
    %84 = arith.mulf %78, %83 : vector<2x64xf32>
    %85 = arith.addf %80, %84 : vector<2x64xf32>
    %86 = math.tanh %85 : vector<2x64xf32>
    %cst_24 = arith.constant 1.000000e+00 : f32
    %87 = vector.broadcast %cst_24 : f32 to vector<2x64xf32>
    %88 = arith.subf %87, %79 : vector<2x64xf32>
    %89 = arith.mulf %88, %86 : vector<2x64xf32>
    %90 = arith.mulf %79, %61 : vector<2x64xf32>
    %91 = arith.addf %89, %90 : vector<2x64xf32>
    %92 = arith.index_cast %c2_i32 : i32 to index
    %c0_25 = arith.constant 0 : index
    %c0_26 = arith.constant 0 : index
    %93 = vector.load %arg5[%92, %c0_25, %c0_26] : memref<8x2x64xf32, #tpu.memory_space<vmem>>, vector<1x2x64xf32>
    %94 = vector.shape_cast %93 : vector<1x2x64xf32> to vector<2x64xf32>
    %95 = vector.shape_cast %91 : vector<2x64xf32> to vector<1x2x64xf32>
    tpu.vector_store %arg5[%92, %c0_25, %c0_26], %95 {strides = array<i32>} : memref<8x2x64xf32, #tpu.memory_space<vmem>>, vector<1x2x64xf32>,
    %c3_i32 = arith.constant 3 : i32
    %cst_27 = arith.constant dense<0.000000e+00> : vector<2x192xf32>
    %96 = tpu.matmul %91, %3, %cst_27 {dimension_numbers = #tpu.dot_dimension_numbers<[1], [0], [0], [1], [0, 0, 1, 1], [], []>} : vector<2x64xf32>, vector<64x192xf32>, vector<2x192xf32> -> vector<2x192xf32>
    %97 = arith.index_cast %c3_i32 : i32 to index
    %c0_28 = arith.constant 0 : index
    %c0_29 = arith.constant 0 : index
    %98 = vector.load %arg1[%97, %c0_28, %c0_29] : memref<8x2x192xf32, #tpu.memory_space<vmem>>, vector<1x2x192xf32>
    %99 = vector.shape_cast %98 : vector<1x2x192xf32> to vector<2x192xf32>
    %100 = vector.extract_strided_slice %99 {offsets = [0, 0], sizes = [2, 128], strides = [1, 1]} : vector<2x192xf32> to vector<2x128xf32>
    %101 = vector.extract_strided_slice %96 {offsets = [0, 0], sizes = [2, 128], strides = [1, 1]} : vector<2x192xf32> to vector<2x128xf32>
    %102 = arith.addf %100, %101 : vector<2x128xf32>
    %103 = arith.negf %102 : vector<2x128xf32>
    %104 = math.exp %103 : vector<2x128xf32>
    %cst_30 = arith.constant 1.000000e+00 : f32
    %105 = vector.broadcast %cst_30 : f32 to vector<2x128xf32>
    %106 = arith.addf %105, %104 : vector<2x128xf32>
    %107 = arith.divf %105, %106 : vector<2x128xf32>
    %108 = vector.extract_strided_slice %107 {offsets = [0, 0], sizes = [2, 64], strides = [1, 1]} : vector<2x128xf32> to vector<2x64xf32>
    %109 = vector.extract_strided_slice %107 {offsets = [0, 64], sizes = [2, 64], strides = [1, 1]} : vector<2x128xf32> to vector<2x64xf32>
    %110 = vector.extract_strided_slice %99 {offsets = [0, 128], sizes = [2, 64], strides = [1, 1]} : vector<2x192xf32> to vector<2x64xf32>
    %111 = vector.extract_strided_slice %96 {offsets = [0, 128], sizes = [2, 64], strides = [1, 1]} : vector<2x192xf32> to vector<2x64xf32>
    %112 = vector.broadcast %4 : vector<1x64xf32> to vector<2x64xf32>
    %113 = arith.addf %111, %112 : vector<2x64xf32>
    %114 = arith.mulf %108, %113 : vector<2x64xf32>
    %115 = arith.addf %110, %114 : vector<2x64xf32>
    %116 = math.tanh %115 : vector<2x64xf32>
    %cst_31 = arith.constant 1.000000e+00 : f32
    %117 = vector.broadcast %cst_31 : f32 to vector<2x64xf32>
    %118 = arith.subf %117, %109 : vector<2x64xf32>
    %119 = arith.mulf %118, %116 : vector<2x64xf32>
    %120 = arith.mulf %109, %91 : vector<2x64xf32>
    %121 = arith.addf %119, %120 : vector<2x64xf32>
    %122 = arith.index_cast %c3_i32 : i32 to index
    %c0_32 = arith.constant 0 : index
    %c0_33 = arith.constant 0 : index
    %123 = vector.load %arg5[%122, %c0_32, %c0_33] : memref<8x2x64xf32, #tpu.memory_space<vmem>>, vector<1x2x64xf32>
    %124 = vector.shape_cast %123 : vector<1x2x64xf32> to vector<2x64xf32>
    %125 = vector.shape_cast %121 : vector<2x64xf32> to vector<1x2x64xf32>
    tpu.vector_store %arg5[%122, %c0_32, %c0_33], %125 {strides = array<i32>} : memref<8x2x64xf32, #tpu.memory_space<vmem>>, vector<1x2x64xf32>,
    %c4_i32 = arith.constant 4 : i32
    %cst_34 = arith.constant dense<0.000000e+00> : vector<2x192xf32>
    %126 = tpu.matmul %121, %3, %cst_34 {dimension_numbers = #tpu.dot_dimension_numbers<[1], [0], [0], [1], [0, 0, 1, 1], [], []>} : vector<2x64xf32>, vector<64x192xf32>, vector<2x192xf32> -> vector<2x192xf32>
    %127 = arith.index_cast %c4_i32 : i32 to index
    %c0_35 = arith.constant 0 : index
    %c0_36 = arith.constant 0 : index
    %128 = vector.load %arg1[%127, %c0_35, %c0_36] : memref<8x2x192xf32, #tpu.memory_space<vmem>>, vector<1x2x192xf32>
    %129 = vector.shape_cast %128 : vector<1x2x192xf32> to vector<2x192xf32>
    %130 = vector.extract_strided_slice %129 {offsets = [0, 0], sizes = [2, 128], strides = [1, 1]} : vector<2x192xf32> to vector<2x128xf32>
    %131 = vector.extract_strided_slice %126 {offsets = [0, 0], sizes = [2, 128], strides = [1, 1]} : vector<2x192xf32> to vector<2x128xf32>
    %132 = arith.addf %130, %131 : vector<2x128xf32>
    %133 = arith.negf %132 : vector<2x128xf32>
    %134 = math.exp %133 : vector<2x128xf32>
    %cst_37 = arith.constant 1.000000e+00 : f32
    %135 = vector.broadcast %cst_37 : f32 to vector<2x128xf32>
    %136 = arith.addf %135, %134 : vector<2x128xf32>
    %137 = arith.divf %135, %136 : vector<2x128xf32>
    %138 = vector.extract_strided_slice %137 {offsets = [0, 0], sizes = [2, 64], strides = [1, 1]} : vector<2x128xf32> to vector<2x64xf32>
    %139 = vector.extract_strided_slice %137 {offsets = [0, 64], sizes = [2, 64], strides = [1, 1]} : vector<2x128xf32> to vector<2x64xf32>
    %140 = vector.extract_strided_slice %129 {offsets = [0, 128], sizes = [2, 64], strides = [1, 1]} : vector<2x192xf32> to vector<2x64xf32>
    %141 = vector.extract_strided_slice %126 {offsets = [0, 128], sizes = [2, 64], strides = [1, 1]} : vector<2x192xf32> to vector<2x64xf32>
    %142 = vector.broadcast %4 : vector<1x64xf32> to vector<2x64xf32>
    %143 = arith.addf %141, %142 : vector<2x64xf32>
    %144 = arith.mulf %138, %143 : vector<2x64xf32>
    %145 = arith.addf %140, %144 : vector<2x64xf32>
    %146 = math.tanh %145 : vector<2x64xf32>
    %cst_38 = arith.constant 1.000000e+00 : f32
    %147 = vector.broadcast %cst_38 : f32 to vector<2x64xf32>
    %148 = arith.subf %147, %139 : vector<2x64xf32>
    %149 = arith.mulf %148, %146 : vector<2x64xf32>
    %150 = arith.mulf %139, %121 : vector<2x64xf32>
    %151 = arith.addf %149, %150 : vector<2x64xf32>
    %152 = arith.index_cast %c4_i32 : i32 to index
    %c0_39 = arith.constant 0 : index
    %c0_40 = arith.constant 0 : index
    %153 = vector.load %arg5[%152, %c0_39, %c0_40] : memref<8x2x64xf32, #tpu.memory_space<vmem>>, vector<1x2x64xf32>
    %154 = vector.shape_cast %153 : vector<1x2x64xf32> to vector<2x64xf32>
    %155 = vector.shape_cast %151 : vector<2x64xf32> to vector<1x2x64xf32>
    tpu.vector_store %arg5[%152, %c0_39, %c0_40], %155 {strides = array<i32>} : memref<8x2x64xf32, #tpu.memory_space<vmem>>, vector<1x2x64xf32>,
    %c5_i32 = arith.constant 5 : i32
    %cst_41 = arith.constant dense<0.000000e+00> : vector<2x192xf32>
    %156 = tpu.matmul %151, %3, %cst_41 {dimension_numbers = #tpu.dot_dimension_numbers<[1], [0], [0], [1], [0, 0, 1, 1], [], []>} : vector<2x64xf32>, vector<64x192xf32>, vector<2x192xf32> -> vector<2x192xf32>
    %157 = arith.index_cast %c5_i32 : i32 to index
    %c0_42 = arith.constant 0 : index
    %c0_43 = arith.constant 0 : index
    %158 = vector.load %arg1[%157, %c0_42, %c0_43] : memref<8x2x192xf32, #tpu.memory_space<vmem>>, vector<1x2x192xf32>
    %159 = vector.shape_cast %158 : vector<1x2x192xf32> to vector<2x192xf32>
    %160 = vector.extract_strided_slice %159 {offsets = [0, 0], sizes = [2, 128], strides = [1, 1]} : vector<2x192xf32> to vector<2x128xf32>
    %161 = vector.extract_strided_slice %156 {offsets = [0, 0], sizes = [2, 128], strides = [1, 1]} : vector<2x192xf32> to vector<2x128xf32>
    %162 = arith.addf %160, %161 : vector<2x128xf32>
    %163 = arith.negf %162 : vector<2x128xf32>
    %164 = math.exp %163 : vector<2x128xf32>
    %cst_44 = arith.constant 1.000000e+00 : f32
    %165 = vector.broadcast %cst_44 : f32 to vector<2x128xf32>
    %166 = arith.addf %165, %164 : vector<2x128xf32>
    %167 = arith.divf %165, %166 : vector<2x128xf32>
    %168 = vector.extract_strided_slice %167 {offsets = [0, 0], sizes = [2, 64], strides = [1, 1]} : vector<2x128xf32> to vector<2x64xf32>
    %169 = vector.extract_strided_slice %167 {offsets = [0, 64], sizes = [2, 64], strides = [1, 1]} : vector<2x128xf32> to vector<2x64xf32>
    %170 = vector.extract_strided_slice %159 {offsets = [0, 128], sizes = [2, 64], strides = [1, 1]} : vector<2x192xf32> to vector<2x64xf32>
    %171 = vector.extract_strided_slice %156 {offsets = [0, 128], sizes = [2, 64], strides = [1, 1]} : vector<2x192xf32> to vector<2x64xf32>
    %172 = vector.broadcast %4 : vector<1x64xf32> to vector<2x64xf32>
    %173 = arith.addf %171, %172 : vector<2x64xf32>
    %174 = arith.mulf %168, %173 : vector<2x64xf32>
    %175 = arith.addf %170, %174 : vector<2x64xf32>
    %176 = math.tanh %175 : vector<2x64xf32>
    %cst_45 = arith.constant 1.000000e+00 : f32
    %177 = vector.broadcast %cst_45 : f32 to vector<2x64xf32>
    %178 = arith.subf %177, %169 : vector<2x64xf32>
    %179 = arith.mulf %178, %176 : vector<2x64xf32>
    %180 = arith.mulf %169, %151 : vector<2x64xf32>
    %181 = arith.addf %179, %180 : vector<2x64xf32>
    %182 = arith.index_cast %c5_i32 : i32 to index
    %c0_46 = arith.constant 0 : index
    %c0_47 = arith.constant 0 : index
    %183 = vector.load %arg5[%182, %c0_46, %c0_47] : memref<8x2x64xf32, #tpu.memory_space<vmem>>, vector<1x2x64xf32>
    %184 = vector.shape_cast %183 : vector<1x2x64xf32> to vector<2x64xf32>
    %185 = vector.shape_cast %181 : vector<2x64xf32> to vector<1x2x64xf32>
    tpu.vector_store %arg5[%182, %c0_46, %c0_47], %185 {strides = array<i32>} : memref<8x2x64xf32, #tpu.memory_space<vmem>>, vector<1x2x64xf32>,
    %c6_i32 = arith.constant 6 : i32
    %cst_48 = arith.constant dense<0.000000e+00> : vector<2x192xf32>
    %186 = tpu.matmul %181, %3, %cst_48 {dimension_numbers = #tpu.dot_dimension_numbers<[1], [0], [0], [1], [0, 0, 1, 1], [], []>} : vector<2x64xf32>, vector<64x192xf32>, vector<2x192xf32> -> vector<2x192xf32>
    %187 = arith.index_cast %c6_i32 : i32 to index
    %c0_49 = arith.constant 0 : index
    %c0_50 = arith.constant 0 : index
    %188 = vector.load %arg1[%187, %c0_49, %c0_50] : memref<8x2x192xf32, #tpu.memory_space<vmem>>, vector<1x2x192xf32>
    %189 = vector.shape_cast %188 : vector<1x2x192xf32> to vector<2x192xf32>
    %190 = vector.extract_strided_slice %189 {offsets = [0, 0], sizes = [2, 128], strides = [1, 1]} : vector<2x192xf32> to vector<2x128xf32>
    %191 = vector.extract_strided_slice %186 {offsets = [0, 0], sizes = [2, 128], strides = [1, 1]} : vector<2x192xf32> to vector<2x128xf32>
    %192 = arith.addf %190, %191 : vector<2x128xf32>
    %193 = arith.negf %192 : vector<2x128xf32>
    %194 = math.exp %193 : vector<2x128xf32>
    %cst_51 = arith.constant 1.000000e+00 : f32
    %195 = vector.broadcast %cst_51 : f32 to vector<2x128xf32>
    %196 = arith.addf %195, %194 : vector<2x128xf32>
    %197 = arith.divf %195, %196 : vector<2x128xf32>
    %198 = vector.extract_strided_slice %197 {offsets = [0, 0], sizes = [2, 64], strides = [1, 1]} : vector<2x128xf32> to vector<2x64xf32>
    %199 = vector.extract_strided_slice %197 {offsets = [0, 64], sizes = [2, 64], strides = [1, 1]} : vector<2x128xf32> to vector<2x64xf32>
    %200 = vector.extract_strided_slice %189 {offsets = [0, 128], sizes = [2, 64], strides = [1, 1]} : vector<2x192xf32> to vector<2x64xf32>
    %201 = vector.extract_strided_slice %186 {offsets = [0, 128], sizes = [2, 64], strides = [1, 1]} : vector<2x192xf32> to vector<2x64xf32>
    %202 = vector.broadcast %4 : vector<1x64xf32> to vector<2x64xf32>
    %203 = arith.addf %201, %202 : vector<2x64xf32>
    %204 = arith.mulf %198, %203 : vector<2x64xf32>
    %205 = arith.addf %200, %204 : vector<2x64xf32>
    %206 = math.tanh %205 : vector<2x64xf32>
    %cst_52 = arith.constant 1.000000e+00 : f32
    %207 = vector.broadcast %cst_52 : f32 to vector<2x64xf32>
    %208 = arith.subf %207, %199 : vector<2x64xf32>
    %209 = arith.mulf %208, %206 : vector<2x64xf32>
    %210 = arith.mulf %199, %181 : vector<2x64xf32>
    %211 = arith.addf %209, %210 : vector<2x64xf32>
    %212 = arith.index_cast %c6_i32 : i32 to index
    %c0_53 = arith.constant 0 : index
    %c0_54 = arith.constant 0 : index
    %213 = vector.load %arg5[%212, %c0_53, %c0_54] : memref<8x2x64xf32, #tpu.memory_space<vmem>>, vector<1x2x64xf32>
    %214 = vector.shape_cast %213 : vector<1x2x64xf32> to vector<2x64xf32>
    %215 = vector.shape_cast %211 : vector<2x64xf32> to vector<1x2x64xf32>
    tpu.vector_store %arg5[%212, %c0_53, %c0_54], %215 {strides = array<i32>} : memref<8x2x64xf32, #tpu.memory_space<vmem>>, vector<1x2x64xf32>,
    %c7_i32 = arith.constant 7 : i32
    %cst_55 = arith.constant dense<0.000000e+00> : vector<2x192xf32>
    %216 = tpu.matmul %211, %3, %cst_55 {dimension_numbers = #tpu.dot_dimension_numbers<[1], [0], [0], [1], [0, 0, 1, 1], [], []>} : vector<2x64xf32>, vector<64x192xf32>, vector<2x192xf32> -> vector<2x192xf32>
    %217 = arith.index_cast %c7_i32 : i32 to index
    %c0_56 = arith.constant 0 : index
    %c0_57 = arith.constant 0 : index
    %218 = vector.load %arg1[%217, %c0_56, %c0_57] : memref<8x2x192xf32, #tpu.memory_space<vmem>>, vector<1x2x192xf32>
    %219 = vector.shape_cast %218 : vector<1x2x192xf32> to vector<2x192xf32>
    %220 = vector.extract_strided_slice %219 {offsets = [0, 0], sizes = [2, 128], strides = [1, 1]} : vector<2x192xf32> to vector<2x128xf32>
    %221 = vector.extract_strided_slice %216 {offsets = [0, 0], sizes = [2, 128], strides = [1, 1]} : vector<2x192xf32> to vector<2x128xf32>
    %222 = arith.addf %220, %221 : vector<2x128xf32>
    %223 = arith.negf %222 : vector<2x128xf32>
    %224 = math.exp %223 : vector<2x128xf32>
    %cst_58 = arith.constant 1.000000e+00 : f32
    %225 = vector.broadcast %cst_58 : f32 to vector<2x128xf32>
    %226 = arith.addf %225, %224 : vector<2x128xf32>
    %227 = arith.divf %225, %226 : vector<2x128xf32>
    %228 = vector.extract_strided_slice %227 {offsets = [0, 0], sizes = [2, 64], strides = [1, 1]} : vector<2x128xf32> to vector<2x64xf32>
    %229 = vector.extract_strided_slice %227 {offsets = [0, 64], sizes = [2, 64], strides = [1, 1]} : vector<2x128xf32> to vector<2x64xf32>
    %230 = vector.extract_strided_slice %219 {offsets = [0, 128], sizes = [2, 64], strides = [1, 1]} : vector<2x192xf32> to vector<2x64xf32>
    %231 = vector.extract_strided_slice %216 {offsets = [0, 128], sizes = [2, 64], strides = [1, 1]} : vector<2x192xf32> to vector<2x64xf32>
    %232 = vector.broadcast %4 : vector<1x64xf32> to vector<2x64xf32>
    %233 = arith.addf %231, %232 : vector<2x64xf32>
    %234 = arith.mulf %228, %233 : vector<2x64xf32>
    %235 = arith.addf %230, %234 : vector<2x64xf32>
    %236 = math.tanh %235 : vector<2x64xf32>
    %cst_59 = arith.constant 1.000000e+00 : f32
    %237 = vector.broadcast %cst_59 : f32 to vector<2x64xf32>
    %238 = arith.subf %237, %229 : vector<2x64xf32>
    %239 = arith.mulf %238, %236 : vector<2x64xf32>
    %240 = arith.mulf %229, %211 : vector<2x64xf32>
    %241 = arith.addf %239, %240 : vector<2x64xf32>
    %242 = arith.index_cast %c7_i32 : i32 to index
    %c0_60 = arith.constant 0 : index
    %c0_61 = arith.constant 0 : index
    %243 = vector.load %arg5[%242, %c0_60, %c0_61] : memref<8x2x64xf32, #tpu.memory_space<vmem>>, vector<1x2x64xf32>
    %244 = vector.shape_cast %243 : vector<1x2x64xf32> to vector<2x64xf32>
    %245 = vector.shape_cast %241 : vector<2x64xf32> to vector<1x2x64xf32>
    tpu.vector_store %arg5[%242, %c0_60, %c0_61], %245 {strides = array<i32>} : memref<8x2x64xf32, #tpu.memory_space<vmem>>, vector<1x2x64xf32>,
    %c8_i32 = arith.constant 8 : i32
    %c0_62 = arith.constant 0 : index
    %c0_63 = arith.constant 0 : index
    %246 = vector.load %arg6[%c0_62, %c0_63] : memref<2x64xf32, #tpu.memory_space<vmem>>, vector<2x64xf32>
    tpu.vector_store %arg6[%c0_62, %c0_63], %241 {strides = array<i32>} : memref<2x64xf32, #tpu.memory_space<vmem>>, vector<2x64xf32>,
    return
  }
  func.func @transform_0(%arg0: i32) -> (i32, i32, i32) {
    %c0_i32 = arith.constant 0 : i32
    %c0_i32_0 = arith.constant 0 : i32
    %c0_i32_1 = arith.constant 0 : i32
    return %arg0, %c0_i32, %c0_i32_0 : i32, i32, i32
  }
  func.func @transform_1(%arg0: i32) -> (i32, i32) {
    %c0_i32 = arith.constant 0 : i32
    %c0_i32_0 = arith.constant 0 : i32
    %c0_i32_1 = arith.constant 0 : i32
    return %c0_i32, %c0_i32_0 : i32, i32
  }
  func.func @transform_2(%arg0: i32) -> (i32, i32) {
    %c0_i32 = arith.constant 0 : i32
    %c0_i32_0 = arith.constant 0 : i32
    %c0_i32_1 = arith.constant 0 : i32
    return %c0_i32, %c0_i32_0 : i32, i32
  }
  func.func @transform_3(%arg0: i32) -> (i32, i32) {
    %c0_i32 = arith.constant 0 : i32
    %c0_i32_0 = arith.constant 0 : i32
    %c0_i32_1 = arith.constant 0 : i32
    return %c0_i32, %c0_i32_0 : i32, i32
  }
  func.func @transform_4(%arg0: i32) -> (i32, i32, i32) {
    %c0_i32 = arith.constant 0 : i32
    %c0_i32_0 = arith.constant 0 : i32
    %c0_i32_1 = arith.constant 0 : i32
    return %arg0, %c0_i32, %c0_i32_0 : i32, i32, i32
  }
}

</mosaic_0001>

<llo_original>
// kernel: tpu_custom_call.1
$region0: #{tpu_custom_call.1}
  #allocation0 [shape = 'u32[]', space=smem, size = 0x4, offset = 0x4, fixed_abs, tag = 'smem constant byte address 0x4 - core index']
  #allocation1 [shape = 'u32[72,128]{1,0:T(1,128)}', space=vmem, size = 0x9000, scoped, tag = 'internal scratch']
  #allocation2 [shape = 'f32[2,64]{1,0:T(2,128)}', space=vmem, size = 0x400, scoped, tag = 'scratch operand']
  %s0 = inlined_call_operand.hbm [shape: f32[8,2,192], index: 0, kind: input, shape index: {}]
  %s1 = inlined_call_operand.hbm [shape: f32[2,64], index: 1, kind: input, shape index: {}]
  %s2 = inlined_call_operand.hbm [shape: f32[64,192], index: 2, kind: input, shape index: {}]
  %s3 = inlined_call_operand.vmem [shape: f32[1,64], index: 3, kind: input, shape index: {}]
  %s4 = inlined_call_operand.hbm [shape: f32[8,2,64], index: 4, kind: output, shape index: {}]
  %s5 = sld [smem:[#allocation0]]
  $region42: #{tpu_custom_call.1} parent=0
    _
  %s7 = ssub.s32 1, %s5
  %s8 = scalar_select 0, %s7, %s5
  $region1: #{tpu_custom_call.1} parent=0
    #allocation3 [shape = 'u8[16384]{0}', space=vmem, size = 0x4000, scoped, tag = 'input window, operand 0, single buffered']
    #allocation4 [shape = 's32[1]{0}', space=sflag, size = 0x4, scoped, tag = 'scoped memory for tpu_custom_call.1']
    #allocation5 [shape = 's32[1]{0}', space=sflag, size = 0x4, scoped, tag = 'scoped memory for tpu_custom_call.1']
    #allocation6 [shape = 'u8[1024]{0}', space=vmem, size = 0x400, scoped, tag = 'input window, operand 1, single buffered']
    #allocation7 [shape = 's32[1]{0}', space=sflag, size = 0x4, scoped, tag = 'scoped memory for tpu_custom_call.1']
    #allocation8 [shape = 'u8[65536]{0}', space=vmem, size = 0x10000, scoped, tag = 'input window, operand 2, single buffered']
    #allocation9 [shape = 'u8[8192]{0}', space=vmem, size = 0x2000, scoped, tag = 'output window, operand 0, single buffered']
    %9 = vsyncpa [#allocation4], 0
    %10 = vsyncpa [#allocation7], 0
    %11 = vsyncpa [#allocation5], 0
    // Predicated region
    $region2: #{tpu_custom_call.1} parent=1 // pred_check
      _
    $region3: #{tpu_custom_call.1} parent=1 // pred_check_branch
      %13 = sbr.rel (0) target = $region5
    $region4: #{tpu_custom_call.1} parent=1 // pred_region
      %15 = vsyncadd [#allocation4], 0
      %s16 = sshll.u32 %s0, 4
      %s17 = int_to_ptr.hbm [resolvable:$true] %s16
      %s18 = sshll.u32 [#allocation3], 4
      %s19 = int_to_ptr.vmem [resolvable:$true] %s18
      %24 = dma.hbm_to_vmem [thread:$0]  %s17, 512, %s19, [#allocation4], 64, 64, 4
    $region5: #{tpu_custom_call.1} parent=1 // pred_fallthru
      _
    // Predicated region
    $region6: #{tpu_custom_call.1} parent=1 // pred_check
      _
    $region7: #{tpu_custom_call.1} parent=1 // pred_check_branch
      %26 = sbr.rel (0) target = $region9
    $region8: #{tpu_custom_call.1} parent=1 // pred_region
      %28 = vsyncadd [#allocation7], 0
      %s30 = sshll.u32 %s1, 4
      %s31 = int_to_ptr.hbm [resolvable:$true] %s30
      %s32 = sshll.u32 [#allocation6], 4
      %s33 = int_to_ptr.vmem [resolvable:$true] %s32
      %35 = dma.hbm_to_vmem [thread:$0]  %s31, 32, %s33, [#allocation7]
    $region9: #{tpu_custom_call.1} parent=1 // pred_fallthru
      _
    // Predicated region
    $region10: #{tpu_custom_call.1} parent=1 // pred_check
      _
    $region11: #{tpu_custom_call.1} parent=1 // pred_check_branch
      %37 = sbr.rel (0) target = $region13
    $region12: #{tpu_custom_call.1} parent=1 // pred_region
      %39 = vsyncadd [#allocation7], 0
      %s40 = sshll.u32 %s2, 4
      %s41 = int_to_ptr.hbm [resolvable:$true] %s40
      %s42 = sshll.u32 [#allocation8], 4
      %s43 = int_to_ptr.vmem [resolvable:$true] %s42
      %48 = dma.hbm_to_vmem [thread:$0]  %s41, 2048, %s43, [#allocation7], 256, 256, 16
    $region13: #{tpu_custom_call.1} parent=1 // pred_fallthru
      _
    // Predicated region
    $region14: #{tpu_custom_call.1} parent=1 // pred_check
      _
    $region15: #{tpu_custom_call.1} parent=1 // pred_check_branch
      %50 = sbr.rel (0) target = $region17
    $region16: #{tpu_custom_call.1} parent=1 // pred_region
      _
    $region17: #{tpu_custom_call.1} parent=1 // pred_fallthru
      _
    // Predicated region
    $region18: #{tpu_custom_call.1} parent=1 // pred_check
      _
    $region19: #{tpu_custom_call.1} parent=1 // pred_check_branch
      %52 = sbr.rel (0) target = $region21
    $region20: #{tpu_custom_call.1} parent=1 // pred_region
      %54 = dma.done [#allocation4], 512
    $region21: #{tpu_custom_call.1} parent=1 // pred_fallthru
      _
    // Predicated region
    $region22: #{tpu_custom_call.1} parent=1 // pred_check
      _
    $region23: #{tpu_custom_call.1} parent=1 // pred_check_branch
      %56 = sbr.rel (0) target = $region25
    $region24: #{tpu_custom_call.1} parent=1 // pred_region
      %58 = dma.done [#allocation7], 32
    $region25: #{tpu_custom_call.1} parent=1 // pred_fallthru
      _
    // Predicated region
    $region26: #{tpu_custom_call.1} parent=1 // pred_check
      _
    $region27: #{tpu_custom_call.1} parent=1 // pred_check_branch
      %60 = sbr.rel (0) target = $region29
    $region28: #{tpu_custom_call.1} parent=1 // pred_region
      %62 = dma.done [#allocation7], 2048
    $region29: #{tpu_custom_call.1} parent=1 // pred_fallthru
      _
    %p63 = scmp.eq.s32.totalorder 0, 0
    // Predicated region
    $region30: #{tpu_custom_call.1} parent=1 // pred_check
      %p64 = pneg %p63
    $region31: #{tpu_custom_call.1} parent=1 // pred_check_branch
      %66 = sbr.rel (%p64) target = $region33
    $region32: #{tpu_custom_call.1} parent=1 // pred_region
      %v67 = vld [vmem:[#allocation6] sm:$0x3]
      %vm68 = vcmask 517120
      %69 = vst.msk [vmem:[#allocation2] sm:$0x3] %vm68, %v67
    $region33: #{tpu_custom_call.1} parent=1 // pred_fallthru
      _
    %v70 = vld [vmem:[#allocation8] sm:$0xff]
    %v71 = vld [vmem:[#allocation8 + $0x8] sm:$0xff]
    %v72 = vld [vmem:[#allocation8 + $0x10] sm:$0xff]
    %v73 = vld [vmem:[#allocation8 + $0x18] sm:$0xff]
    %v74 = vld [vmem:[#allocation8 + $0x20] sm:$0xff]
    %v75 = vld [vmem:[#allocation8 + $0x28] sm:$0xff]
    %v76 = vld [vmem:[#allocation8 + $0x30] sm:$0xff]
    %v77 = vld [vmem:[#allocation8 + $0x38] sm:$0xff]
    %v78 = vld [vmem:[#allocation8 + $0x40] sm:$0xff]
    %v79 = vld [vmem:[#allocation8 + $0x48] sm:$0xff]
    %v80 = vld [vmem:[#allocation8 + $0x50] sm:$0xff]
    %v81 = vld [vmem:[#allocation8 + $0x58] sm:$0xff]
    %v82 = vld [vmem:[#allocation8 + $0x60] sm:$0xff]
    %v83 = vld [vmem:[#allocation8 + $0x68] sm:$0xff]
    %v84 = vld [vmem:[#allocation8 + $0x70] sm:$0xff]
    %v85 = vld [vmem:[#allocation8 + $0x78] sm:$0xff]
    %v86 = vld [vmem:[%s3] sm:$0x1]
    %v87 = vld [vmem:[#allocation2] sm:$0x3]
    %vm88 = vcmask 523264
    %v90 = vsel %vm88, %v87, 0
    %92 = vmatpush.msra.mxu0 0.0
    %93 = vmatpush.msra.mxu0 0.0
    %94 = vmatpush.msra.mxu0 0.0
    %95 = vmatpush.msra.mxu0 0.0
    %96 = vmatpush.msra.mxu0 0.0
    %97 = vmatpush.msra.mxu0 0.0
    %98 = vmatpush.msra.mxu0 0.0
    %99 = vmatpush.msra.mxu0 0.0
    %100 = vmatpush.msra.mxu0 %v84
    %101 = vmatpush.msra.mxu0 %v82
    %102 = vmatpush.msra.mxu0 %v80
    %103 = vmatpush.msra.mxu0 %v78
    %104 = vmatpush.msra.mxu0 %v76
    %105 = vmatpush.msra.mxu0 %v74
    %106 = vmatpush.msra.mxu0 %v72
    %107 = vmatpush.msra.mxu0 %v70
    %108 = vmatmul.f32.gmra.mxu0 %v90
    %v109 = vpop.f32.mrf.mxu0
    %v110 = vadd.f32 0.0, %v109
    %111 = vdwg.mxu0
    %112 = vmatpush.msra.mxu0 0.0
    %113 = vmatpush.msra.mxu0 0.0
    %114 = vmatpush.msra.mxu0 0.0
    %115 = vmatpush.msra.mxu0 0.0
    %116 = vmatpush.msra.mxu0 0.0
    %117 = vmatpush.msra.mxu0 0.0
    %118 = vmatpush.msra.mxu0 0.0
    %119 = vmatpush.msra.mxu0 0.0
    %120 = vmatpush.msra.mxu0 %v85
    %121 = vmatpush.msra.mxu0 %v83
    %122 = vmatpush.msra.mxu0 %v81
    %123 = vmatpush.msra.mxu0 %v79
    %124 = vmatpush.msra.mxu0 %v77
    %125 = vmatpush.msra.mxu0 %v75
    %126 = vmatpush.msra.mxu0 %v73
    %127 = vmatpush.msra.mxu0 %v71
    %128 = vmatmul.f32.gmra.mxu0 %v90
    %v129 = vpop.f32.mrf.mxu0
    %v130 = vadd.f32 0.0, %v129
    %131 = vdwg.mxu0
    %v132 = vld [vmem:[#allocation3] sm:$0xf]
    %v133 = vadd.f32 %v132, %v110
    %v134 = vxor.u32 %v133, 2147483648
    %v135 = vmul.f32 %v134, 1.442695
    %v136 = vpow.pop %v135
    %v137 = vadd.f32 %v136, 1.0
    %v138 = vrcp.pop %v137
    %v139 = vmul.f32 %v137, %v138
    %v140 = vsub.f32 1.0, %v139
    %v141 = vmul.f32 %v138, %v140
    %v142 = vadd.f32 %v138, %v141
    %vm143 = vweird.f32 %v137
    %vm144 = vweird.f32 %v138
    %vm145 = vmor %vm143, %vm144
    %v146 = vsel %vm145, %v138, %v142
    %v147 = vand.u32 2147483647, %v137
    %vm148 = vcmp.eq.f32.partialorder %v147, 8.507059e+37
    %v149 = vand.u32 %v137, 2147483648
    %v150 = vor.u32 1.1754944e-38, %v149
    %v151 = vsel %vm148, %v150, %v146
    %v152 = vmul.f32 1.0, %v151
    %v154 = vperm.slane %v86, 0
    %v156 = vadd.f32 %v130, %v154
    %v157 = vmul.f32 %v152, %v156
    %v159 = vrot.slane %v132, 2
    %v161 = vadd.f32 %v159, %v157
    %v162 = vtanh.pop %v161
    %v163 = vsub.f32 1.0, %v152
    %165 = vrot.lane.b32.xlu0 %v162, 64
    %v166 = vpop.permute.xlu0 %165
    %v168 = vmul.f32 %v163, %v166
    %169 = vrot.lane.b32.xlu0 %v87, 64
    %v170 = vpop.permute.xlu0 %169
    %v172 = vmul.f32 %v152, %v170
    %v173 = vadd.f32 %v168, %v172
    %175 = vst [vmem:[#allocation1] ss:$4 sm:$0xff] %v173
    %v176 = vld.sshfl [vmem:[#allocation1] sm:$0xff pattern:$0x73625140]
    %177 = vrot.lane.b32.xlu0 %v176, 64
    %v178 = vpop.permute.xlu0 %177
    %vm180 = vcmask 517120
    %181 = vst.msk [vmem:[#allocation9] sm:$0x3] %vm180, %v178
    %182 = vst [vmem:[#allocation1] ss:$4 sm:$0xff] %v173
    %v183 = vld.sshfl [vmem:[#allocation1] sm:$0xff pattern:$0x73625140]
    %184 = vrot.lane.b32.xlu0 %v183, 64
    %v185 = vpop.permute.xlu0 %184
    %v186 = vsel %vm88, %v185, 0
    %188 = vmatpush.msra.mxu0 0.0
    %189 = vmatpush.msra.mxu0 0.0
    %190 = vmatpush.msra.mxu0 0.0
    %191 = vmatpush.msra.mxu0 0.0
    %192 = vmatpush.msra.mxu0 0.0
    %193 = vmatpush.msra.mxu0 0.0
    %194 = vmatpush.msra.mxu0 0.0
    %195 = vmatpush.msra.mxu0 0.0
    %196 = vmatpush.msra.mxu0 %v84
    %197 = vmatpush.msra.mxu0 %v82
    %198 = vmatpush.msra.mxu0 %v80
    %199 = vmatpush.msra.mxu0 %v78
    %200 = vmatpush.msra.mxu0 %v76
    %201 = vmatpush.msra.mxu0 %v74
    %202 = vmatpush.msra.mxu0 %v72
    %203 = vmatpush.msra.mxu0 %v70
    %204 = vmatmul.f32.gmra.mxu0 %v186
    %v205 = vpop.f32.mrf.mxu0
    %v206 = vadd.f32 0.0, %v205
    %207 = vdwg.mxu0
    %208 = vmatpush.msra.mxu0 0.0
    %209 = vmatpush.msra.mxu0 0.0
    %210 = vmatpush.msra.mxu0 0.0
    %211 = vmatpush.msra.mxu0 0.0
    %212 = vmatpush.msra.mxu0 0.0
    %213 = vmatpush.msra.mxu0 0.0
    %214 = vmatpush.msra.mxu0 0.0
    %215 = vmatpush.msra.mxu0 0.0
    %216 = vmatpush.msra.mxu0 %v85
    %217 = vmatpush.msra.mxu0 %v83
    %218 = vmatpush.msra.mxu0 %v81
    %219 = vmatpush.msra.mxu0 %v79
    %220 = vmatpush.msra.mxu0 %v77
    %221 = vmatpush.msra.mxu0 %v75
    %222 = vmatpush.msra.mxu0 %v73
    %223 = vmatpush.msra.mxu0 %v71
    %224 = vmatmul.f32.gmra.mxu0 %v186
    %v225 = vpop.f32.mrf.mxu0
    %v226 = vadd.f32 0.0, %v225
    %227 = vdwg.mxu0
    %s228 = scalar_lea.vmem [#allocation3], 4
    %v229 = vld [vmem:[%s228] sm:$0xf]
    %v230 = vadd.f32 %v229, %v206
    %v231 = vxor.u32 %v230, 2147483648
    %v232 = vmul.f32 %v231, 1.442695
    %v233 = vpow.pop %v232
    %v234 = vadd.f32 %v233, 1.0
    %v235 = vrcp.pop %v234
    %v236 = vmul.f32 %v234, %v235
    %v237 = vsub.f32 1.0, %v236
    %v238 = vmul.f32 %v235, %v237
    %v239 = vadd.f32 %v235, %v238
    %vm240 = vweird.f32 %v234
    %vm241 = vweird.f32 %v235
    %vm242 = vmor %vm240, %vm241
    %v243 = vsel %vm242, %v235, %v239
    %v244 = vand.u32 2147483647, %v234
    %vm245 = vcmp.eq.f32.partialorder %v244, 8.507059e+37
    %v246 = vand.u32 %v234, 2147483648
    %v247 = vor.u32 1.1754944e-38, %v246
    %v248 = vsel %vm245, %v247, %v243
    %v249 = vmul.f32 1.0, %v248
    %v250 = vadd.f32 %v226, %v154
    %v251 = vmul.f32 %v249, %v250
    %v253 = vrot.slane %v229, 2
    %v255 = vadd.f32 %v253, %v251
    %v256 = vtanh.pop %v255
    %v257 = vsub.f32 1.0, %v249
    %259 = vrot.lane.b32.xlu0 %v256, 64
    %v260 = vpop.permute.xlu0 %259
    %v262 = vmul.f32 %v257, %v260
    %v263 = vmul.f32 %v249, %v173
    %v264 = vadd.f32 %v262, %v263
    %266 = vst [vmem:[#allocation1] ss:$4 sm:$0xff] %v264
    %v267 = vld.sshfl [vmem:[#allocation1] sm:$0xff pattern:$0x73625140]
    %268 = vrot.lane.b32.xlu0 %v267, 64
    %v269 = vpop.permute.xlu0 %268
    %s271 = scalar_lea.vmem [#allocation9], 2
    %272 = vst.msk [vmem:[%s271] sm:$0x3] %vm180, %v269
    %273 = vst [vmem:[#allocation1] ss:$4 sm:$0xff] %v264
    %v274 = vld.sshfl [vmem:[#allocation1] sm:$0xff pattern:$0x73625140]
    %275 = vrot.lane.b32.xlu0 %v274, 64
    %v276 = vpop.permute.xlu0 %275
    %v277 = vsel %vm88, %v276, 0
    %279 = vmatpush.msra.mxu0 0.0
    %280 = vmatpush.msra.mxu0 0.0
    %281 = vmatpush.msra.mxu0 0.0
    %282 = vmatpush.msra.mxu0 0.0
    %283 = vmatpush.msra.mxu0 0.0
    %284 = vmatpush.msra.mxu0 0.0
    %285 = vmatpush.msra.mxu0 0.0
    %286 = vmatpush.msra.mxu0 0.0
    %287 = vmatpush.msra.mxu0 %v84
    %288 = vmatpush.msra.mxu0 %v82
    %289 = vmatpush.msra.mxu0 %v80
    %290 = vmatpush.msra.mxu0 %v78
    %291 = vmatpush.msra.mxu0 %v76
    %292 = vmatpush.msra.mxu0 %v74
    %293 = vmatpush.msra.mxu0 %v72
    %294 = vmatpush.msra.mxu0 %v70
    %295 = vmatmul.f32.gmra.mxu0 %v277
    %v296 = vpop.f32.mrf.mxu0
    %v297 = vadd.f32 0.0, %v296
    %298 = vdwg.mxu0
    %299 = vmatpush.msra.mxu0 0.0
    %300 = vmatpush.msra.mxu0 0.0
    %301 = vmatpush.msra.mxu0 0.0
    %302 = vmatpush.msra.mxu0 0.0
    %303 = vmatpush.msra.mxu0 0.0
    %304 = vmatpush.msra.mxu0 0.0
    %305 = vmatpush.msra.mxu0 0.0
    %306 = vmatpush.msra.mxu0 0.0
    %307 = vmatpush.msra.mxu0 %v85
    %308 = vmatpush.msra.mxu0 %v83
    %309 = vmatpush.msra.mxu0 %v81
    %310 = vmatpush.msra.mxu0 %v79
    %311 = vmatpush.msra.mxu0 %v77
    %312 = vmatpush.msra.mxu0 %v75
    %313 = vmatpush.msra.mxu0 %v73
    %314 = vmatpush.msra.mxu0 %v71
    %315 = vmatmul.f32.gmra.mxu0 %v277
    %v316 = vpop.f32.mrf.mxu0
    %v317 = vadd.f32 0.0, %v316
    %318 = vdwg.mxu0
    %s319 = scalar_lea.vmem [#allocation3], 8
    %v320 = vld [vmem:[%s319] sm:$0xf]
    %v321 = vadd.f32 %v320, %v297
    %v322 = vxor.u32 %v321, 2147483648
    %v323 = vmul.f32 %v322, 1.442695
    %v324 = vpow.pop %v323
    %v325 = vadd.f32 %v324, 1.0
    %v326 = vrcp.pop %v325
    %v327 = vmul.f32 %v325, %v326
    %v328 = vsub.f32 1.0, %v327
    %v329 = vmul.f32 %v326, %v328
    %v330 = vadd.f32 %v326, %v329
    %vm331 = vweird.f32 %v325
    %vm332 = vweird.f32 %v326
    %vm333 = vmor %vm331, %vm332
    %v334 = vsel %vm333, %v326, %v330
    %v335 = vand.u32 2147483647, %v325
    %vm336 = vcmp.eq.f32.partialorder %v335, 8.507059e+37
    %v337 = vand.u32 %v325, 2147483648
    %v338 = vor.u32 1.1754944e-38, %v337
    %v339 = vsel %vm336, %v338, %v334
    %v340 = vmul.f32 1.0, %v339
    %v341 = vadd.f32 %v317, %v154
    %v342 = vmul.f32 %v340, %v341
    %v344 = vrot.slane %v320, 2
    %v346 = vadd.f32 %v344, %v342
    %v347 = vtanh.pop %v346
    %v348 = vsub.f32 1.0, %v340
    %350 = vrot.lane.b32.xlu0 %v347, 64
    %v351 = vpop.permute.xlu0 %350
    %v353 = vmul.f32 %v348, %v351
    %v354 = vmul.f32 %v340, %v264
    %v355 = vadd.f32 %v353, %v354
    %357 = vst [vmem:[#allocation1] ss:$4 sm:$0xff] %v355
    %v358 = vld.sshfl [vmem:[#allocation1] sm:$0xff pattern:$0x73625140]
    %359 = vrot.lane.b32.xlu0 %v358, 64
    %v360 = vpop.permute.xlu0 %359
    %s362 = scalar_lea.vmem [#allocation9], 4
    %363 = vst.msk [vmem:[%s362] sm:$0x3] %vm180, %v360
    %364 = vst [vmem:[#allocation1] ss:$4 sm:$0xff] %v355
    %v365 = vld.sshfl [vmem:[#allocation1] sm:$0xff pattern:$0x73625140]
    %366 = vrot.lane.b32.xlu0 %v365, 64
    %v367 = vpop.permute.xlu0 %366
    %v368 = vsel %vm88, %v367, 0
    %370 = vmatpush.msra.mxu0 0.0
    %371 = vmatpush.msra.mxu0 0.0
    %372 = vmatpush.msra.mxu0 0.0
    %373 = vmatpush.msra.mxu0 0.0
    %374 = vmatpush.msra.mxu0 0.0
    %375 = vmatpush.msra.mxu0 0.0
    %376 = vmatpush.msra.mxu0 0.0
    %377 = vmatpush.msra.mxu0 0.0
    %378 = vmatpush.msra.mxu0 %v84
    %379 = vmatpush.msra.mxu0 %v82
    %380 = vmatpush.msra.mxu0 %v80
    %381 = vmatpush.msra.mxu0 %v78
    %382 = vmatpush.msra.mxu0 %v76
    %383 = vmatpush.msra.mxu0 %v74
    %384 = vmatpush.msra.mxu0 %v72
    %385 = vmatpush.msra.mxu0 %v70
    %386 = vmatmul.f32.gmra.mxu0 %v368
    %v387 = vpop.f32.mrf.mxu0
    %v388 = vadd.f32 0.0, %v387
    %389 = vdwg.mxu0
    %390 = vmatpush.msra.mxu0 0.0
    %391 = vmatpush.msra.mxu0 0.0
    %392 = vmatpush.msra.mxu0 0.0
    %393 = vmatpush.msra.mxu0 0.0
    %394 = vmatpush.msra.mxu0 0.0
    %395 = vmatpush.msra.mxu0 0.0
    %396 = vmatpush.msra.mxu0 0.0
    %397 = vmatpush.msra.mxu0 0.0
    %398 = vmatpush.msra.mxu0 %v85
    %399 = vmatpush.msra.mxu0 %v83
    %400 = vmatpush.msra.mxu0 %v81
    %401 = vmatpush.msra.mxu0 %v79
    %402 = vmatpush.msra.mxu0 %v77
    %403 = vmatpush.msra.mxu0 %v75
    %404 = vmatpush.msra.mxu0 %v73
    %405 = vmatpush.msra.mxu0 %v71
    %406 = vmatmul.f32.gmra.mxu0 %v368
    %v407 = vpop.f32.mrf.mxu0
    %v408 = vadd.f32 0.0, %v407
    %409 = vdwg.mxu0
    %s410 = scalar_lea.vmem [#allocation3], 12
    %v411 = vld [vmem:[%s410] sm:$0xf]
    %v412 = vadd.f32 %v411, %v388
    %v413 = vxor.u32 %v412, 2147483648
    %v414 = vmul.f32 %v413, 1.442695
    %v415 = vpow.pop %v414
    %v416 = vadd.f32 %v415, 1.0
    %v417 = vrcp.pop %v416
    %v418 = vmul.f32 %v416, %v417
    %v419 = vsub.f32 1.0, %v418
    %v420 = vmul.f32 %v417, %v419
    %v421 = vadd.f32 %v417, %v420
    %vm422 = vweird.f32 %v416
    %vm423 = vweird.f32 %v417
    %vm424 = vmor %vm422, %vm423
    %v425 = vsel %vm424, %v417, %v421
    %v426 = vand.u32 2147483647, %v416
    %vm427 = vcmp.eq.f32.partialorder %v426, 8.507059e+37
    %v428 = vand.u32 %v416, 2147483648
    %v429 = vor.u32 1.1754944e-38, %v428
    %v430 = vsel %vm427, %v429, %v425
    %v431 = vmul.f32 1.0, %v430
    %v432 = vadd.f32 %v408, %v154
    %v433 = vmul.f32 %v431, %v432
    %v435 = vrot.slane %v411, 2
    %v437 = vadd.f32 %v435, %v433
    %v438 = vtanh.pop %v437
    %v439 = vsub.f32 1.0, %v431
    %441 = vrot.lane.b32.xlu0 %v438, 64
    %v442 = vpop.permute.xlu0 %441
    %v444 = vmul.f32 %v439, %v442
    %v445 = vmul.f32 %v431, %v355
    %v446 = vadd.f32 %v444, %v445
    %448 = vst [vmem:[#allocation1] ss:$4 sm:$0xff] %v446
    %v449 = vld.sshfl [vmem:[#allocation1] sm:$0xff pattern:$0x73625140]
    %450 = vrot.lane.b32.xlu0 %v449, 64
    %v451 = vpop.permute.xlu0 %450
    %s453 = scalar_lea.vmem [#allocation9], 6
    %454 = vst.msk [vmem:[%s453] sm:$0x3] %vm180, %v451
    %455 = vst [vmem:[#allocation1] ss:$4 sm:$0xff] %v446
    %v456 = vld.sshfl [vmem:[#allocation1] sm:$0xff pattern:$0x73625140]
    %457 = vrot.lane.b32.xlu0 %v456, 64
    %v458 = vpop.permute.xlu0 %457
    %v459 = vsel %vm88, %v458, 0
    %461 = vmatpush.msra.mxu0 0.0
    %462 = vmatpush.msra.mxu0 0.0
    %463 = vmatpush.msra.mxu0 0.0
    %464 = vmatpush.msra.mxu0 0.0
    %465 = vmatpush.msra.mxu0 0.0
    %466 = vmatpush.msra.mxu0 0.0
    %467 = vmatpush.msra.mxu0 0.0
    %468 = vmatpush.msra.mxu0 0.0
    %469 = vmatpush.msra.mxu0 %v84
    %470 = vmatpush.msra.mxu0 %v82
    %471 = vmatpush.msra.mxu0 %v80
    %472 = vmatpush.msra.mxu0 %v78
    %473 = vmatpush.msra.mxu0 %v76
    %474 = vmatpush.msra.mxu0 %v74
    %475 = vmatpush.msra.mxu0 %v72
    %476 = vmatpush.msra.mxu0 %v70
    %477 = vmatmul.f32.gmra.mxu0 %v459
    %v478 = vpop.f32.mrf.mxu0
    %v479 = vadd.f32 0.0, %v478
    %480 = vdwg.mxu0
    %481 = vmatpush.msra.mxu0 0.0
    %482 = vmatpush.msra.mxu0 0.0
    %483 = vmatpush.msra.mxu0 0.0
    %484 = vmatpush.msra.mxu0 0.0
    %485 = vmatpush.msra.mxu0 0.0
    %486 = vmatpush.msra.mxu0 0.0
    %487 = vmatpush.msra.mxu0 0.0
    %488 = vmatpush.msra.mxu0 0.0
    %489 = vmatpush.msra.mxu0 %v85
    %490 = vmatpush.msra.mxu0 %v83
    %491 = vmatpush.msra.mxu0 %v81
    %492 = vmatpush.msra.mxu0 %v79
    %493 = vmatpush.msra.mxu0 %v77
    %494 = vmatpush.msra.mxu0 %v75
    %495 = vmatpush.msra.mxu0 %v73
    %496 = vmatpush.msra.mxu0 %v71
    %497 = vmatmul.f32.gmra.mxu0 %v459
    %v498 = vpop.f32.mrf.mxu0
    %v499 = vadd.f32 0.0, %v498
    %500 = vdwg.mxu0
    %s501 = scalar_lea.vmem [#allocation3], 16
    %v502 = vld [vmem:[%s501] sm:$0xf]
    %v503 = vadd.f32 %v502, %v479
    %v504 = vxor.u32 %v503, 2147483648
    %v505 = vmul.f32 %v504, 1.442695
    %v506 = vpow.pop %v505
    %v507 = vadd.f32 %v506, 1.0
    %v508 = vrcp.pop %v507
    %v509 = vmul.f32 %v507, %v508
    %v510 = vsub.f32 1.0, %v509
    %v511 = vmul.f32 %v508, %v510
    %v512 = vadd.f32 %v508, %v511
    %vm513 = vweird.f32 %v507
    %vm514 = vweird.f32 %v508
    %vm515 = vmor %vm513, %vm514
    %v516 = vsel %vm515, %v508, %v512
    %v517 = vand.u32 2147483647, %v507
    %vm518 = vcmp.eq.f32.partialorder %v517, 8.507059e+37
    %v519 = vand.u32 %v507, 2147483648
    %v520 = vor.u32 1.1754944e-38, %v519
    %v521 = vsel %vm518, %v520, %v516
    %v522 = vmul.f32 1.0, %v521
    %v523 = vadd.f32 %v499, %v154
    %v524 = vmul.f32 %v522, %v523
    %v526 = vrot.slane %v502, 2
    %v528 = vadd.f32 %v526, %v524
    %v529 = vtanh.pop %v528
    %v530 = vsub.f32 1.0, %v522
    %532 = vrot.lane.b32.xlu0 %v529, 64
    %v533 = vpop.permute.xlu0 %532
    %v535 = vmul.f32 %v530, %v533
    %v536 = vmul.f32 %v522, %v446
    %v537 = vadd.f32 %v535, %v536
    %539 = vst [vmem:[#allocation1] ss:$4 sm:$0xff] %v537
    %v540 = vld.sshfl [vmem:[#allocation1] sm:$0xff pattern:$0x73625140]
    %541 = vrot.lane.b32.xlu0 %v540, 64
    %v542 = vpop.permute.xlu0 %541
    %s544 = scalar_lea.vmem [#allocation9], 8
    %545 = vst.msk [vmem:[%s544] sm:$0x3] %vm180, %v542
    %546 = vst [vmem:[#allocation1] ss:$4 sm:$0xff] %v537
    %v547 = vld.sshfl [vmem:[#allocation1] sm:$0xff pattern:$0x73625140]
    %548 = vrot.lane.b32.xlu0 %v547, 64
    %v549 = vpop.permute.xlu0 %548
    %v550 = vsel %vm88, %v549, 0
    %552 = vmatpush.msra.mxu0 0.0
    %553 = vmatpush.msra.mxu0 0.0
    %554 = vmatpush.msra.mxu0 0.0
    %555 = vmatpush.msra.mxu0 0.0
    %556 = vmatpush.msra.mxu0 0.0
    %557 = vmatpush.msra.mxu0 0.0
    %558 = vmatpush.msra.mxu0 0.0
    %559 = vmatpush.msra.mxu0 0.0
    %560 = vmatpush.msra.mxu0 %v84
    %561 = vmatpush.msra.mxu0 %v82
    %562 = vmatpush.msra.mxu0 %v80
    %563 = vmatpush.msra.mxu0 %v78
    %564 = vmatpush.msra.mxu0 %v76
    %565 = vmatpush.msra.mxu0 %v74
    %566 = vmatpush.msra.mxu0 %v72
    %567 = vmatpush.msra.mxu0 %v70
    %568 = vmatmul.f32.gmra.mxu0 %v550
    %v569 = vpop.f32.mrf.mxu0
    %v570 = vadd.f32 0.0, %v569
    %571 = vdwg.mxu0
    %572 = vmatpush.msra.mxu0 0.0
    %573 = vmatpush.msra.mxu0 0.0
    %574 = vmatpush.msra.mxu0 0.0
    %575 = vmatpush.msra.mxu0 0.0
    %576 = vmatpush.msra.mxu0 0.0
    %577 = vmatpush.msra.mxu0 0.0
    %578 = vmatpush.msra.mxu0 0.0
    %579 = vmatpush.msra.mxu0 0.0
    %580 = vmatpush.msra.mxu0 %v85
    %581 = vmatpush.msra.mxu0 %v83
    %582 = vmatpush.msra.mxu0 %v81
    %583 = vmatpush.msra.mxu0 %v79
    %584 = vmatpush.msra.mxu0 %v77
    %585 = vmatpush.msra.mxu0 %v75
    %586 = vmatpush.msra.mxu0 %v73
    %587 = vmatpush.msra.mxu0 %v71
    %588 = vmatmul.f32.gmra.mxu0 %v550
    %v589 = vpop.f32.mrf.mxu0
    %v590 = vadd.f32 0.0, %v589
    %591 = vdwg.mxu0
    %s592 = scalar_lea.vmem [#allocation3], 20
    %v593 = vld [vmem:[%s592] sm:$0xf]
    %v594 = vadd.f32 %v593, %v570
    %v595 = vxor.u32 %v594, 2147483648
    %v596 = vmul.f32 %v595, 1.442695
    %v597 = vpow.pop %v596
    %v598 = vadd.f32 %v597, 1.0
    %v599 = vrcp.pop %v598
    %v600 = vmul.f32 %v598, %v599
    %v601 = vsub.f32 1.0, %v600
    %v602 = vmul.f32 %v599, %v601
    %v603 = vadd.f32 %v599, %v602
    %vm604 = vweird.f32 %v598
    %vm605 = vweird.f32 %v599
    %vm606 = vmor %vm604, %vm605
    %v607 = vsel %vm606, %v599, %v603
    %v608 = vand.u32 2147483647, %v598
    %vm609 = vcmp.eq.f32.partialorder %v608, 8.507059e+37
    %v610 = vand.u32 %v598, 2147483648
    %v611 = vor.u32 1.1754944e-38, %v610
    %v612 = vsel %vm609, %v611, %v607
    %v613 = vmul.f32 1.0, %v612
    %v614 = vadd.f32 %v590, %v154
    %v615 = vmul.f32 %v613, %v614
    %v617 = vrot.slane %v593, 2
    %v619 = vadd.f32 %v617, %v615
    %v620 = vtanh.pop %v619
    %v621 = vsub.f32 1.0, %v613
    %623 = vrot.lane.b32.xlu0 %v620, 64
    %v624 = vpop.permute.xlu0 %623
    %v626 = vmul.f32 %v621, %v624
    %v627 = vmul.f32 %v613, %v537
    %v628 = vadd.f32 %v626, %v627
    %630 = vst [vmem:[#allocation1] ss:$4 sm:$0xff] %v628
    %v631 = vld.sshfl [vmem:[#allocation1] sm:$0xff pattern:$0x73625140]
    %632 = vrot.lane.b32.xlu0 %v631, 64
    %v633 = vpop.permute.xlu0 %632
    %s635 = scalar_lea.vmem [#allocation9], 10
    %636 = vst.msk [vmem:[%s635] sm:$0x3] %vm180, %v633
    %637 = vst [vmem:[#allocation1] ss:$4 sm:$0xff] %v628
    %v638 = vld.sshfl [vmem:[#allocation1] sm:$0xff pattern:$0x73625140]
    %639 = vrot.lane.b32.xlu0 %v638, 64
    %v640 = vpop.permute.xlu0 %639
    %v641 = vsel %vm88, %v640, 0
    %643 = vmatpush.msra.mxu0 0.0
    %644 = vmatpush.msra.mxu0 0.0
    %645 = vmatpush.msra.mxu0 0.0
    %646 = vmatpush.msra.mxu0 0.0
    %647 = vmatpush.msra.mxu0 0.0
    %648 = vmatpush.msra.mxu0 0.0
    %649 = vmatpush.msra.mxu0 0.0
    %650 = vmatpush.msra.mxu0 0.0
    %651 = vmatpush.msra.mxu0 %v84
    %652 = vmatpush.msra.mxu0 %v82
    %653 = vmatpush.msra.mxu0 %v80
    %654 = vmatpush.msra.mxu0 %v78
    %655 = vmatpush.msra.mxu0 %v76
    %656 = vmatpush.msra.mxu0 %v74
    %657 = vmatpush.msra.mxu0 %v72
    %658 = vmatpush.msra.mxu0 %v70
    %659 = vmatmul.f32.gmra.mxu0 %v641
    %v660 = vpop.f32.mrf.mxu0
    %v661 = vadd.f32 0.0, %v660
    %662 = vdwg.mxu0
    %663 = vmatpush.msra.mxu0 0.0
    %664 = vmatpush.msra.mxu0 0.0
    %665 = vmatpush.msra.mxu0 0.0
    %666 = vmatpush.msra.mxu0 0.0
    %667 = vmatpush.msra.mxu0 0.0
    %668 = vmatpush.msra.mxu0 0.0
    %669 = vmatpush.msra.mxu0 0.0
    %670 = vmatpush.msra.mxu0 0.0
    %671 = vmatpush.msra.mxu0 %v85
    %672 = vmatpush.msra.mxu0 %v83
    %673 = vmatpush.msra.mxu0 %v81
    %674 = vmatpush.msra.mxu0 %v79
    %675 = vmatpush.msra.mxu0 %v77
    %676 = vmatpush.msra.mxu0 %v75
    %677 = vmatpush.msra.mxu0 %v73
    %678 = vmatpush.msra.mxu0 %v71
    %679 = vmatmul.f32.gmra.mxu0 %v641
    %v680 = vpop.f32.mrf.mxu0
    %v681 = vadd.f32 0.0, %v680
    %682 = vdwg.mxu0
    %s683 = scalar_lea.vmem [#allocation3], 24
    %v684 = vld [vmem:[%s683] sm:$0xf]
    %v685 = vadd.f32 %v684, %v661
    %v686 = vxor.u32 %v685, 2147483648
    %v687 = vmul.f32 %v686, 1.442695
    %v688 = vpow.pop %v687
    %v689 = vadd.f32 %v688, 1.0
    %v690 = vrcp.pop %v689
    %v691 = vmul.f32 %v689, %v690
    %v692 = vsub.f32 1.0, %v691
    %v693 = vmul.f32 %v690, %v692
    %v694 = vadd.f32 %v690, %v693
    %vm695 = vweird.f32 %v689
    %vm696 = vweird.f32 %v690
    %vm697 = vmor %vm695, %vm696
    %v698 = vsel %vm697, %v690, %v694
    %v699 = vand.u32 2147483647, %v689
    %vm700 = vcmp.eq.f32.partialorder %v699, 8.507059e+37
    %v701 = vand.u32 %v689, 2147483648
    %v702 = vor.u32 1.1754944e-38, %v701
    %v703 = vsel %vm700, %v702, %v698
    %v704 = vmul.f32 1.0, %v703
    %v705 = vadd.f32 %v681, %v154
    %v706 = vmul.f32 %v704, %v705
    %v708 = vrot.slane %v684, 2
    %v710 = vadd.f32 %v708, %v706
    %v711 = vtanh.pop %v710
    %v712 = vsub.f32 1.0, %v704
    %714 = vrot.lane.b32.xlu0 %v711, 64
    %v715 = vpop.permute.xlu0 %714
    %v717 = vmul.f32 %v712, %v715
    %v718 = vmul.f32 %v704, %v628
    %v719 = vadd.f32 %v717, %v718
    %721 = vst [vmem:[#allocation1] ss:$4 sm:$0xff] %v719
    %v722 = vld.sshfl [vmem:[#allocation1] sm:$0xff pattern:$0x73625140]
    %723 = vrot.lane.b32.xlu0 %v722, 64
    %v724 = vpop.permute.xlu0 %723
    %s726 = scalar_lea.vmem [#allocation9], 12
    %727 = vst.msk [vmem:[%s726] sm:$0x3] %vm180, %v724
    %728 = vst [vmem:[#allocation1] ss:$4 sm:$0xff] %v719
    %v729 = vld.sshfl [vmem:[#allocation1] sm:$0xff pattern:$0x73625140]
    %730 = vrot.lane.b32.xlu0 %v729, 64
    %v731 = vpop.permute.xlu0 %730
    %v732 = vsel %vm88, %v731, 0
    %734 = vmatpush.msra.mxu0 0.0
    %735 = vmatpush.msra.mxu0 0.0
    %736 = vmatpush.msra.mxu0 0.0
    %737 = vmatpush.msra.mxu0 0.0
    %738 = vmatpush.msra.mxu0 0.0
    %739 = vmatpush.msra.mxu0 0.0
    %740 = vmatpush.msra.mxu0 0.0
    %741 = vmatpush.msra.mxu0 0.0
    %742 = vmatpush.msra.mxu0 %v84
    %743 = vmatpush.msra.mxu0 %v82
    %744 = vmatpush.msra.mxu0 %v80
    %745 = vmatpush.msra.mxu0 %v78
    %746 = vmatpush.msra.mxu0 %v76
    %747 = vmatpush.msra.mxu0 %v74
    %748 = vmatpush.msra.mxu0 %v72
    %749 = vmatpush.msra.mxu0 %v70
    %750 = vmatmul.f32.gmra.mxu0 %v732
    %v751 = vpop.f32.mrf.mxu0
    %v752 = vadd.f32 0.0, %v751
    %753 = vdwg.mxu0
    %754 = vmatpush.msra.mxu0 0.0
    %755 = vmatpush.msra.mxu0 0.0
    %756 = vmatpush.msra.mxu0 0.0
    %757 = vmatpush.msra.mxu0 0.0
    %758 = vmatpush.msra.mxu0 0.0
    %759 = vmatpush.msra.mxu0 0.0
    %760 = vmatpush.msra.mxu0 0.0
    %761 = vmatpush.msra.mxu0 0.0
    %762 = vmatpush.msra.mxu0 %v85
    %763 = vmatpush.msra.mxu0 %v83
    %764 = vmatpush.msra.mxu0 %v81
    %765 = vmatpush.msra.mxu0 %v79
    %766 = vmatpush.msra.mxu0 %v77
    %767 = vmatpush.msra.mxu0 %v75
    %768 = vmatpush.msra.mxu0 %v73
    %769 = vmatpush.msra.mxu0 %v71
    %770 = vmatmul.f32.gmra.mxu0 %v732
    %v771 = vpop.f32.mrf.mxu0
    %v772 = vadd.f32 0.0, %v771
    %773 = vdwg.mxu0
    %s774 = scalar_lea.vmem [#allocation3], 28
    %v775 = vld [vmem:[%s774] sm:$0xf]
    %v776 = vadd.f32 %v775, %v752
    %v777 = vxor.u32 %v776, 2147483648
    %v778 = vmul.f32 %v777, 1.442695
    %v779 = vpow.pop %v778
    %v780 = vadd.f32 %v779, 1.0
    %v781 = vrcp.pop %v780
    %v782 = vmul.f32 %v780, %v781
    %v783 = vsub.f32 1.0, %v782
    %v784 = vmul.f32 %v781, %v783
    %v785 = vadd.f32 %v781, %v784
    %vm786 = vweird.f32 %v780
    %vm787 = vweird.f32 %v781
    %vm788 = vmor %vm786, %vm787
    %v789 = vsel %vm788, %v781, %v785
    %v790 = vand.u32 2147483647, %v780
    %vm791 = vcmp.eq.f32.partialorder %v790, 8.507059e+37
    %v792 = vand.u32 %v780, 2147483648
    %v793 = vor.u32 1.1754944e-38, %v792
    %v794 = vsel %vm791, %v793, %v789
    %v795 = vmul.f32 1.0, %v794
    %v796 = vadd.f32 %v772, %v154
    %v797 = vmul.f32 %v795, %v796
    %v799 = vrot.slane %v775, 2
    %v801 = vadd.f32 %v799, %v797
    %v802 = vtanh.pop %v801
    %v803 = vsub.f32 1.0, %v795
    %805 = vrot.lane.b32.xlu0 %v802, 64
    %v806 = vpop.permute.xlu0 %805
    %v808 = vmul.f32 %v803, %v806
    %v809 = vmul.f32 %v795, %v719
    %v810 = vadd.f32 %v808, %v809
    %812 = vst [vmem:[#allocation1] ss:$4 sm:$0xff] %v810
    %v813 = vld.sshfl [vmem:[#allocation1] sm:$0xff pattern:$0x73625140]
    %814 = vrot.lane.b32.xlu0 %v813, 64
    %v815 = vpop.permute.xlu0 %814
    %s817 = scalar_lea.vmem [#allocation9], 14
    %818 = vst.msk [vmem:[%s817] sm:$0x3] %vm180, %v815
    %819 = vst [vmem:[#allocation1] ss:$4 sm:$0xff] %v810
    %v820 = vld.sshfl [vmem:[#allocation1] sm:$0xff pattern:$0x73625140]
    %821 = vrot.lane.b32.xlu0 %v820, 64
    %v822 = vpop.permute.xlu0 %821
    %824 = vst.msk [vmem:[#allocation2] sm:$0x3] %vm180, %v822
    // Predicated region
    $region34: #{tpu_custom_call.1} parent=1 // pred_check
      _
    $region35: #{tpu_custom_call.1} parent=1 // pred_check_branch
      %826 = sbr.rel (0) target = $region37
    $region36: #{tpu_custom_call.1} parent=1 // pred_region
      %828 = vsyncadd [#allocation5], 0
      %s829 = sshll.u32 [#allocation9], 4
      %s830 = int_to_ptr.vmem [resolvable:$true] %s829
      %s831 = sshll.u32 %s4, 4
      %s832 = int_to_ptr.hbm [resolvable:$true] %s831
      %837 = dma.vmem_to_hbm [thread:$0]  %s830, 256, %s832, [#allocation5], 32, 32, 2
    $region37: #{tpu_custom_call.1} parent=1 // pred_fallthru
      _
    // Predicated region
    $region38: #{tpu_custom_call.1} parent=1 // pred_check
      _
    $region39: #{tpu_custom_call.1} parent=1 // pred_check_branch
      %839 = sbr.rel (0) target = $region41
    $region40: #{tpu_custom_call.1} parent=1 // pred_region
      %841 = dma.done [#allocation5], 256
    $region41: #{tpu_custom_call.1} parent=1 // pred_fallthru
      _
    %842 = vsyncpa [#allocation4], 1
    %843 = vsyncpa [#allocation7], 1
    %844 = vsyncpa [#allocation5], 1

</llo_original>
